<compile_context>
chip_gen: v6e
topology: v6e:2x2x1
jax: 0.10.0
libtpu: 0.0.40
codegen_flags: <defaults>
</compile_context>

<pallas_src>
import functools

import jax
import jax.numpy as jnp
from jax import lax
from jax.experimental import pallas as pl
from jax.experimental.pallas import tpu as pltpu

_P = 8  # padded channel count (exactly one sublane group)


# -----------------------------------------------------------------------------
# One-time probe of the pltpu.roll rotation convention (jnp.roll-compatible,
# i.e. elements move toward higher indices, or the opposite), so the static
# shift amounts used by the conv taps are always assigned to the right weights.
_ROLL_IS_JNP_CONVENTION = None


def _roll_convention():
    global _ROLL_IS_JNP_CONVENTION
    if _ROLL_IS_JNP_CONVENTION is None:
        def probe(x_ref, o_ref):
            o_ref[...] = pltpu.roll(x_ref[...], shift=1, axis=1)

        x = jnp.tile(lax.iota(jnp.float32, 128)[None, :], (8, 1))
        y = pl.pallas_call(
            probe, out_shape=jax.ShapeDtypeStruct((8, 128), jnp.float32))(x)
        # jnp.roll convention: rolling by +1 brings the last element to front.
        _ROLL_IS_JNP_CONVENTION = bool(jax.device_get(y[0, 0]) == 127.0)
    return _ROLL_IS_JNP_CONVENTION


# -----------------------------------------------------------------------------
def _gspnp_kernel(alpha, H, W, roll_is_jnp,
                  xin_ref, w1_ref, b1_ref, w2_ref, b2_ref, w2t_ref, w1t_ref,
                  out_ref):
    """One image per grid step: x_hat = x - alpha*(x - N - J^T(x - N))."""
    HW = H * W
    P = xin_ref.shape[1]

    xin = xin_ref[0]                                    # (P, HW) lane-dense plane

    # Pixel row / column index planes (computed once, reused by all 4 convs).
    q = lax.broadcasted_iota(jnp.int32, (P, HW), 1)
    row = q // W
    col = q % W

    # For each 3x3 tap: circular lane shift + validity mask.  The mask zeroes
    # both the out-of-image taps (SAME zero padding) and every lane that the
    # circular wrap of the flattened image contaminates, so no padded scratch
    # buffers are needed at all.
    taps = []
    for dy in range(3):
        for dx in range(3):
            conds = []
            if dy == 0:
                conds.append(row >= 1)
            elif dy == 2:
                conds.append(row <= H - 2)
            if dx == 0:
                conds.append(col >= 1)
            elif dx == 2:
                conds.append(col <= W - 2)
            mask = None
            for c in conds:
                mask = c if mask is None else jnp.logical_and(mask, c)
            s = (dy - 1) * W + (dx - 1)           # want shifted[p] = plane[p + s]
            amount = (-s) % HW if roll_is_jnp else s % HW
            taps.append((s, amount, mask))

    def conv3x3(plane, w_ref, b_ref=None):
        # im2col on the lane axis: 9 rolled+masked copies stacked on sublanes
        # (aligned, P rows each), contracted in a single fused MXU matmul.
        pieces = []
        for s, amount, mask in taps:
            shifted = plane if s == 0 else pltpu.roll(plane, shift=amount, axis=1)
            pieces.append(shifted if mask is None
                          else jnp.where(mask, shifted, 0.0))
        col_mat = jnp.concatenate(pieces, axis=0)                 # (9P, HW)
        acc = jnp.dot(w_ref[...], col_mat,
                      preferred_element_type=jnp.float32)         # (P, HW)
        if b_ref is not None:
            acc = acc + b_ref[...]                                # (P, 1) bias
        return acc

    # ---- denoiser forward: N = conv2(relu(conv1([x, sigma]))) --------------
    h_pre = conv3x3(xin, w1_ref, b1_ref)           # (P, HW)
    h = jnp.maximum(h_pre, 0.0)
    N = conv3x3(h, w2_ref, b2_ref)                 # rows >= C are zero

    v = xin - N                                    # cotangent (x - N); the
                                                   # sigma row feeds only zero
                                                   # weights downstream.

    # ---- analytic VJP of the denoiser wrt x, cotangent v (autograd.grad) ---
    dh = conv3x3(v, w2t_ref)                       # conv2^T
    dh = jnp.where(h_pre > 0.0, dh, 0.0)           # ReLU backward
    JN = conv3x3(dh, w1t_ref)                      # conv1^T (image channels)

    Dg = alpha * (v - JN)
    out_ref[0] = (xin - Dg).astype(out_ref.dtype)  # rows >= C are discarded


# -----------------------------------------------------------------------------
def gspnp_forward(x_nchw, sigma, params, alpha=1.0):
    """GSPnP.forward.  x_nchw: (B, C, H, W), sigma: python float."""
    w1, b1, w2, b2 = params                    # w1: (3,3,C+1,F), w2: (3,3,F,C)
    B, C, H, W = x_nchw.shape
    F = w1.shape[-1]
    P = _P
    if C + 1 > P or F > P:
        raise NotImplementedError("channel counts above 8 need a wider pad")
    HW = H * W

    # Lane-dense input planes (B, P, H*W): rows = [x channels, sigma, zeros].
    x32 = x_nchw.astype(jnp.float32)
    xin = jnp.concatenate(
        [x32.reshape(B, C, HW),
         jnp.full((B, 1, HW), sigma, jnp.float32),
         jnp.zeros((B, P - C - 1, HW), jnp.float32)], axis=1)

    # Transposed-conv weights for the VJP path (pure parameter glue).
    w2t = jnp.transpose(w2[::-1, ::-1], (0, 1, 3, 2))             # (3,3,C,F)
    w1t = jnp.transpose(w1[::-1, ::-1, :C, :], (0, 1, 3, 2))      # (3,3,F,C)

    def pack_w(w):       # (3,3,cin,cout) -> (P, 9*P);  col index = tap*P + cin
        cin, cout = w.shape[2], w.shape[3]
        wp = jnp.zeros((3, 3, P, P), jnp.float32)
        wp = wp.at[:, :, :cin, :cout].set(w.astype(jnp.float32))
        return jnp.transpose(wp, (3, 0, 1, 2)).reshape(P, 9 * P)

    def pack_b(b):
        return jnp.zeros((P, 1), jnp.float32).at[:b.shape[0], 0].set(
            b.astype(jnp.float32))

    w1f, w2f, w2tf, w1tf = pack_w(w1), pack_w(w2), pack_w(w2t), pack_w(w1t)
    b1c, b2c = pack_b(b1), pack_b(b2)

    kernel = functools.partial(_gspnp_kernel, float(alpha), H, W,
                               _roll_convention())

    def fixed(shape):
        return pl.BlockSpec(shape, lambda b, _n=len(shape): (0,) * _n)

    out = pl.pallas_call(
        kernel,
        out_shape=jax.ShapeDtypeStruct((B, P, HW), jnp.float32),
        grid_spec=pltpu.PrefetchScalarGridSpec(
            num_scalar_prefetch=0,
            grid=(B,),                        # one image per step; "parallel"
            in_specs=[                        # -> 2-TC split on v7x
                pl.BlockSpec((1, P, HW), lambda b: (b, 0, 0)),
                fixed((P, 9 * P)), fixed((P, 1)),
                fixed((P, 9 * P)), fixed((P, 1)),
                fixed((P, 9 * P)), fixed((P, 9 * P)),
            ],
            out_specs=pl.BlockSpec((1, P, HW), lambda b: (b, 0, 0)),
        ),
        compiler_params=pltpu.CompilerParams(
            dimension_semantics=("parallel",)),
    )(xin, w1f, b1c, w2f, b2c, w2tf, w1tf)

    # (B, P, H*W) -> (B, C, H, W): drop pad rows; ordering is already NCHW.
    return out[:, :C, :].reshape(B, C, H, W)


# ---------------- pure-JAX reference (mirrors the PyTorch semantics) ----------
def _denoiser_ref(x_nhwc, sigma, w1, b1, w2, b2):
    B, H, W, C = x_nhwc.shape
    smap = jnp.full((B, H, W, 1), sigma, x_nhwc.dtype)
    xin = jnp.concatenate([x_nhwc, smap], axis=-1)
    dn = ('NHWC', 'HWIO', 'NHWC')
    h = lax.conv_general_dilated(xin, w1, (1, 1), 'SAME', dimension_numbers=dn,
                                 precision=lax.Precision.HIGHEST) + b1
    h = jnp.maximum(h, 0.0)
    return lax.conv_general_dilated(h, w2, (1, 1), 'SAME', dimension_numbers=dn,
                                    precision=lax.Precision.HIGHEST) + b2


def _gspnp_ref(x_nchw, sigma, params, alpha=1.0):
    w1, b1, w2, b2 = params
    x = jnp.transpose(x_nchw, (0, 2, 3, 1)).astype(jnp.float32)
    N, vjp_fn = jax.vjp(lambda xx: _denoiser_ref(xx, sigma, w1, b1, w2, b2), x)
    JN = vjp_fn(x - N)[0]                     # == torch.autograd.grad(N, x, x - N)
    Dg = alpha * (x - N - JN)
    return jnp.transpose(x - Dg, (0, 3, 1, 2))


if __name__ == "__main__":
    key = jax.random.PRNGKey(0)
    kx, k1, k2, k3, k4 = jax.random.split(key, 5)

    B, C, H, W, F = 2, 4, 16, 16, 8
    sigma = 0.05
    alpha = 1.0

    x = jax.random.normal(kx, (B, C, H, W), jnp.float32)
    w1 = 0.1 * jax.random.normal(k1, (3, 3, C + 1, F), jnp.float32)
    b1 = 0.01 * jax.random.normal(k2, (F,), jnp.float32)
    w2 = 0.1 * jax.random.normal(k3, (3, 3, F, C), jnp.float32)
    b2 = 0.01 * jax.random.normal(k4, (C,), jnp.float32)
    params = (w1, b1, w2, b2)

    out = jax.block_until_ready(gspnp_forward(x, sigma, params, alpha=alpha))
    ref = _gspnp_ref(x, sigma, params, alpha=alpha)

    assert out.shape == x.shape and out.dtype == jnp.float32
    err = float(jnp.max(jnp.abs(out - ref)))
    if not err < 1e-2:
        raise AssertionError(f"kernel/reference mismatch, max abs err = {err}")
    print("KERNEL_OK")
</pallas_src>

<mosaic_0001>
module attributes {stable_mosaic.version = 11 : i64} {
  func.func @probe(%arg0: memref<8x128xf32, #tpu.memory_space<vmem>>, %arg1: memref<8x128xf32, #tpu.memory_space<vmem>>) attributes {dimension_semantics = [], scalar_prefetch = 0 : i64, scratch_operands = 0 : i64, tpu.core_type = #tpu.core_type<tc>} {
    %c0 = arith.constant 0 : index
    %c0_0 = arith.constant 0 : index
    %0 = vector.load %arg0[%c0, %c0_0] : memref<8x128xf32, #tpu.memory_space<vmem>>, vector<8x128xf32>
    %c1_i32 = arith.constant 1 : i32
    %1 = tpu.dynamic_rotate %0 by %c1_i32 dim 1 : vector<8x128xf32>, i32 -> vector<8x128xf32>
    %c0_1 = arith.constant 0 : index
    %c0_2 = arith.constant 0 : index
    %2 = vector.load %arg1[%c0_1, %c0_2] : memref<8x128xf32, #tpu.memory_space<vmem>>, vector<8x128xf32>
    tpu.vector_store %arg1[%c0_1, %c0_2], %1 {strides = array<i32>} : memref<8x128xf32, #tpu.memory_space<vmem>>, vector<8x128xf32>,
    return
  }
}

</mosaic_0001>

<llo_original>
// kernel: tpu_custom_call.1
$region0: #{tpu_custom_call.1}
  #allocation0 [shape = 'u32[]', space=smem, size = 0x4, offset = 0x4, fixed_abs, tag = 'smem constant byte address 0x4 - core index']
  #allocation1 [shape = 'u32[144,128]{1,0:T(1,128)}', space=vmem, size = 0x12000, scoped, tag = 'internal scratch']
  %s0 = inlined_call_operand.hbm [shape: f32[8,128], index: 0, kind: input, shape index: {}]
  %s1 = inlined_call_operand.hbm [shape: f32[8,128], index: 1, kind: output, shape index: {}]
  %s2 = sld [smem:[#allocation0]]
  $region18: #{tpu_custom_call.1} parent=0
    _
  %s4 = ssub.s32 1, %s2
  %s5 = scalar_select 0, %s4, %s2
  $region1: #{tpu_custom_call.1} parent=0
    #allocation2 [shape = 'u8[4096]{0}', space=vmem, size = 0x1000, scoped, tag = 'input window, operand 0, single buffered']
    #allocation3 [shape = 's32[1]{0}', space=sflag, size = 0x4, scoped, tag = 'scoped memory for tpu_custom_call.1']
    #allocation4 [shape = 's32[1]{0}', space=sflag, size = 0x4, scoped, tag = 'scoped memory for tpu_custom_call.1']
    #allocation5 [shape = 'u8[4096]{0}', space=vmem, size = 0x1000, scoped, tag = 'output window, operand 0, single buffered']
    %6 = vsyncpa [#allocation3], 0
    %7 = vsyncpa [#allocation4], 0
    // Predicated region
    $region2: #{tpu_custom_call.1} parent=1 // pred_check
      _
    $region3: #{tpu_custom_call.1} parent=1 // pred_check_branch
      %9 = sbr.rel (0) target = $region5
    $region4: #{tpu_custom_call.1} parent=1 // pred_region
      %s11 = ssub.s32 128, 128
      %12 = vsyncadd [#allocation3], %s11
      %s14 = sshll.u32 [#allocation2], 4
      %s15 = int_to_ptr.vmem [resolvable:$true] %s14
      %17 = dma.hbm_to_vmem [thread:$0]  %s0, 128, %s15, [#allocation3]
    $region5: #{tpu_custom_call.1} parent=1 // pred_fallthru
      _
    // Predicated region
    $region6: #{tpu_custom_call.1} parent=1 // pred_check
      _
    $region7: #{tpu_custom_call.1} parent=1 // pred_check_branch
      %19 = sbr.rel (0) target = $region9
    $region8: #{tpu_custom_call.1} parent=1 // pred_region
      %20 = dma.done [#allocation3], 128
    $region9: #{tpu_custom_call.1} parent=1 // pred_fallthru
      _
    %v21 = vld [vmem:[#allocation2] sm:$0xff]
    %22 = vrot.lane.b32.xlu0 %v21, 1
    %v23 = vpop.permute.xlu0 %22
    %24 = vst [vmem:[#allocation5] sm:$0xff] %v23
    // Predicated region
    $region10: #{tpu_custom_call.1} parent=1 // pred_check
      _
    $region11: #{tpu_custom_call.1} parent=1 // pred_check_branch
      %26 = sbr.rel (0) target = $region13
    $region12: #{tpu_custom_call.1} parent=1 // pred_region
      %s28 = ssub.s32 128, 128
      %29 = vsyncadd [#allocation4], %s28
      %s31 = sshll.u32 [#allocation5], 4
      %s32 = int_to_ptr.vmem [resolvable:$true] %s31
      %34 = dma.vmem_to_hbm [thread:$0]  %s32, 128, %s1, [#allocation4]
    $region13: #{tpu_custom_call.1} parent=1 // pred_fallthru
      _
    // Predicated region
    $region14: #{tpu_custom_call.1} parent=1 // pred_check
      _
    $region15: #{tpu_custom_call.1} parent=1 // pred_check_branch
      %36 = sbr.rel (0) target = $region17
    $region16: #{tpu_custom_call.1} parent=1 // pred_region
      %37 = dma.done [#allocation4], 128
    $region17: #{tpu_custom_call.1} parent=1 // pred_fallthru
      _
    %38 = vsyncpa [#allocation3], 1
    %39 = vsyncpa [#allocation4], 1

</llo_original>
